<compile_context>
chip_gen: v7x
topology: tpu7x:2x2x1
jax: 0.10.0
libtpu: 0.0.40
codegen_flags: <defaults>
</compile_context>

<pallas_src>
import functools

import jax
import jax.numpy as jnp
from jax.experimental import pallas as pl
from jax.experimental.pallas import tpu as pltpu


def _recon_loss_kernel(p_ref, y_hat_ref, y_ref, o_ref, *, batch, inv_batch, masked):
    """One batch-lane tile -> one scaled scalar partial, written lane-dense."""
    x = y_hat_ref[...].astype(jnp.float32)   # [N, TB] logits
    t = y_ref[...].astype(jnp.float32)       # [1, TB] targets (broadcast over N)
    p = p_ref[...].astype(jnp.float32)       # [N, TB] halting probabilities

    # Numerically stable BCE-with-logits, elementwise (reduction='none'):
    #   bce(x, t) = max(x, 0) - x*t + log1p(exp(-|x|))
    # (On v6e/v7x the softplus term could be computed in bf16 if EUP ever
    #  becomes binding; keep f32 here for exactness on all generations.)
    bce = jnp.maximum(x, 0.0) - x * t + jnp.log1p(jnp.exp(-jnp.abs(x)))
    contrib = p * bce

    if masked:
        # Ragged tail tile: lanes >= batch contain unspecified data (the input
        # was NOT padded in the wrapper).  Mask the product, not just p, so
        # NaN/Inf garbage cannot propagate.
        j = pl.program_id(0)
        tb = contrib.shape[-1]
        lane = jax.lax.broadcasted_iota(jnp.int32, contrib.shape, dimension=1)
        contrib = jnp.where(j * tb + lane < batch, contrib, 0.0)

    # Single sublane+lane reduce per tile; 1/B scale folded in here.
    partial = jnp.sum(contrib) * inv_batch
    o_ref[...] = jnp.full(o_ref.shape, partial, dtype=o_ref.dtype)


def _round_up(x, m):
    return ((x + m - 1) // m) * m


def _choose_lane_tile(n, p_itemsize, yhat_itemsize, y_itemsize,
                      vmem_budget_bytes, max_lane_tile=64 * 1024):
    """Largest 128-multiple lane tile whose pipelined blocks fit the budget."""
    # Double-buffered input blocks per lane, plus headroom for a few f32
    # (N, TB) in-kernel temporaries.
    per_lane = 2 * (n * (p_itemsize + yhat_itemsize) + y_itemsize) + 4 * n * 4
    tb = vmem_budget_bytes // per_lane
    tb = max(128, min(max_lane_tile, (tb // 128) * 128))
    return int(tb)


def reconstruction_loss(p, y_hat, y, *, lane_tile=None,
                        vmem_budget_bytes=8 * 1024 * 1024):
    """PonderNet reconstruction loss with BCE-with-logits.

    p:     [N, B]  halting probabilities (f32 or bf16)
    y_hat: [N, B]  logits                (f32 or bf16)
    y:     [B]     binary targets
    returns scalar f32:  sum_n mean_b( p[n] * bce(y_hat[n], y) )
    """
    assert p.ndim == 2
    n, b = p.shape
    assert y_hat.shape == (n, b) and y.shape == (b,)

    if lane_tile is None:
        tb_budget = _choose_lane_tile(n, p.dtype.itemsize, y_hat.dtype.itemsize,
                                      y.dtype.itemsize, vmem_budget_bytes)
    else:
        assert lane_tile % 128 == 0
        tb_budget = lane_tile

    if b <= tb_budget:
        # Single block over the full (unpadded) batch: block == full array dim,
        # so no 128-divisibility requirement and no masking needed.
        tb, grid_n, masked = b, 1, False
    else:
        tb = tb_budget
        grid_n = pl.cdiv(b, tb)
        masked = (b % tb) != 0

    kernel = functools.partial(_recon_loss_kernel, batch=b,
                               inv_batch=float(1.0 / b), masked=masked)

    out = pl.pallas_call(
        kernel,
        out_shape=jax.ShapeDtypeStruct((grid_n, 128), jnp.float32),
        grid=(grid_n,),
        in_specs=[
            # If an xprof trace on v5e shows exposed DMA at tile boundaries,
            # add pipeline_mode=pl.Buffered(3) to the two big input specs.
            pl.BlockSpec((n, tb), lambda j: (0, j)),   # p
            pl.BlockSpec((n, tb), lambda j: (0, j)),   # y_hat
            pl.BlockSpec((1, tb), lambda j: (0, j)),   # y row (broadcast in-kernel)
        ],
        out_specs=pl.BlockSpec((1, 128), lambda j: (j, 0)),
        compiler_params=pltpu.CompilerParams(
            # Each tile is independent (disjoint output row) -> parallel axis,
            # shardable across both TensorCores on v7x.
            dimension_semantics=("parallel",),
        ),
    )(p, y_hat, y.reshape(1, b))

    # Tiny final reduce over the per-tile partials (already scaled by 1/B).
    return jnp.sum(out[:, 0])


def _reference(p, y_hat, y):
    # Pure-JAX reference mirroring the PyTorch loop semantics.
    x = y_hat.astype(jnp.float32)
    t = y.astype(jnp.float32)[None, :]
    bce = jnp.maximum(x, 0.0) - x * t + jnp.log1p(jnp.exp(-jnp.abs(x)))
    per_step = jnp.mean(p.astype(jnp.float32) * bce, axis=1)
    return jnp.sum(per_step)


if __name__ == "__main__":
    key = jax.random.PRNGKey(0)
    k1, k2, k3, k4, k5, k6 = jax.random.split(key, 6)

    # Case 1: PonderNet parity-task toy shape -> single full-extent block.
    N, B = 8, 16
    p = jax.nn.softmax(jax.random.normal(k1, (N, B), dtype=jnp.float32), axis=0)
    y_hat = jax.random.normal(k2, (N, B), dtype=jnp.float32)
    y = jax.random.bernoulli(k3, 0.5, (B,)).astype(jnp.float32)

    out1 = jax.block_until_ready(reconstruction_loss(p, y_hat, y))
    ref1 = _reference(p, y_hat, y)
    assert jnp.allclose(out1, ref1, rtol=1e-5, atol=1e-5), (out1, ref1)

    # Case 2: multi-tile "parallel" grid + ragged-tail lane masking
    # (B=250 with a forced 128-lane tile -> grid=(2,), last tile masked).
    N2, B2 = 8, 250
    p_b = jax.nn.softmax(jax.random.normal(k4, (N2, B2), dtype=jnp.float32), axis=0)
    y_hat_b = jax.random.normal(k5, (N2, B2), dtype=jnp.float32)
    y_b = jax.random.bernoulli(k6, 0.5, (B2,)).astype(jnp.float32)

    out2 = jax.block_until_ready(
        reconstruction_loss(p_b, y_hat_b, y_b, lane_tile=128))
    ref2 = _reference(p_b, y_hat_b, y_b)
    assert jnp.allclose(out2, ref2, rtol=1e-5, atol=1e-5), (out2, ref2)

    # Case 3: bf16 p / y_hat pass straight through (kernel upcasts internally,
    # halving HBM traffic for the dominant arrays).
    out3 = jax.block_until_ready(
        reconstruction_loss(p_b.astype(jnp.bfloat16),
                            y_hat_b.astype(jnp.bfloat16), y_b, lane_tile=128))
    ref3 = _reference(p_b.astype(jnp.bfloat16), y_hat_b.astype(jnp.bfloat16), y_b)
    assert jnp.allclose(out3, ref3, rtol=1e-4, atol=1e-4), (out3, ref3)

    print("KERNEL_OK")
</pallas_src>

<mosaic_0001>
module attributes {stable_mosaic.version = 11 : i64} {
  func.func @_recon_loss_kernel(%arg0: i32, %arg1: memref<8x16xf32, #tpu.memory_space<vmem>>, %arg2: memref<8x16xf32, #tpu.memory_space<vmem>>, %arg3: memref<1x16xf32, #tpu.memory_space<vmem>>, %arg4: memref<1x128xf32, #tpu.memory_space<vmem>>) attributes {dimension_semantics = [#tpu.dimension_semantics<parallel>], iteration_bounds = array<i64: 1>, scalar_prefetch = 0 : i64, scratch_operands = 0 : i64, tpu.core_type = #tpu.core_type<tc>, window_params = [{transform_indices = @transform_0, window_bounds = array<i64: 8, 16>}, {transform_indices = @transform_1, window_bounds = array<i64: 8, 16>}, {transform_indices = @transform_2, window_bounds = array<i64: 1, 16>}, {transform_indices = @transform_3, window_bounds = array<i64: 1, 128>}]} {
    %c0 = arith.constant 0 : index
    %c0_0 = arith.constant 0 : index
    %0 = vector.load %arg2[%c0, %c0_0] : memref<8x16xf32, #tpu.memory_space<vmem>>, vector<8x16xf32>
    %c0_1 = arith.constant 0 : index
    %c0_2 = arith.constant 0 : index
    %1 = vector.load %arg3[%c0_1, %c0_2] : memref<1x16xf32, #tpu.memory_space<vmem>>, vector<1x16xf32>
    %c0_3 = arith.constant 0 : index
    %c0_4 = arith.constant 0 : index
    %2 = vector.load %arg1[%c0_3, %c0_4] : memref<8x16xf32, #tpu.memory_space<vmem>>, vector<8x16xf32>
    %cst = arith.constant 0.000000e+00 : f32
    %3 = vector.broadcast %cst : f32 to vector<8x16xf32>
    %4 = arith.maximumf %0, %3 : vector<8x16xf32>
    %5 = vector.broadcast %1 : vector<1x16xf32> to vector<8x16xf32>
    %6 = arith.mulf %0, %5 : vector<8x16xf32>
    %7 = arith.subf %4, %6 : vector<8x16xf32>
    %8 = math.absf %0 : vector<8x16xf32>
    %cst_5 = arith.constant 0.000000e+00 : f32
    %9 = vector.broadcast %cst_5 : f32 to vector<8x16xf32>
    %10 = arith.subf %9, %8 : vector<8x16xf32>
    %11 = math.exp %10 : vector<8x16xf32>
    %12 = math.log1p %11 : vector<8x16xf32>
    %13 = arith.addf %7, %12 : vector<8x16xf32>
    %14 = arith.mulf %2, %13 : vector<8x16xf32>
    %15 = vector.shape_cast %14 : vector<8x16xf32> to vector<1x8x16xf32>
    %cst_6 = arith.constant dense<0.000000e+00> : vector<1xf32>
    %16 = vector.multi_reduction <add>, %15, %cst_6 [1, 2] : vector<1x8x16xf32> to vector<1xf32>
    %17 = vector.shape_cast %16 : vector<1xf32> to vector<1x1x1xf32>
    %18 = vector.extract %17[0, 0, 0] : f32 from vector<1x1x1xf32>
    %cst_7 = arith.constant 6.250000e-02 : f32
    %19 = arith.mulf %18, %cst_7 : f32
    %20 = vector.broadcast %19 : f32 to vector<1x128xf32>
    %c0_8 = arith.constant 0 : index
    %c0_9 = arith.constant 0 : index
    %21 = vector.load %arg4[%c0_8, %c0_9] : memref<1x128xf32, #tpu.memory_space<vmem>>, vector<1x128xf32>
    tpu.vector_store %arg4[%c0_8, %c0_9], %20 {strides = array<i32>} : memref<1x128xf32, #tpu.memory_space<vmem>>, vector<1x128xf32>,
    return
  }
  func.func @transform_0(%arg0: i32) -> (i32, i32) {
    %c0_i32 = arith.constant 0 : i32
    %c0_i32_0 = arith.constant 0 : i32
    return %c0_i32, %arg0 : i32, i32
  }
  func.func @transform_1(%arg0: i32) -> (i32, i32) {
    %c0_i32 = arith.constant 0 : i32
    %c0_i32_0 = arith.constant 0 : i32
    return %c0_i32, %arg0 : i32, i32
  }
  func.func @transform_2(%arg0: i32) -> (i32, i32) {
    %c0_i32 = arith.constant 0 : i32
    %c0_i32_0 = arith.constant 0 : i32
    return %c0_i32, %arg0 : i32, i32
  }
  func.func @transform_3(%arg0: i32) -> (i32, i32) {
    %c0_i32 = arith.constant 0 : i32
    %c0_i32_0 = arith.constant 0 : i32
    return %arg0, %c0_i32 : i32, i32
  }
}

</mosaic_0001>

<llo_original>
// kernel: tpu_custom_call.1
$region0: #{tpu_custom_call.1}
  #allocation0 [shape = 'u32[]', space=smem, size = 0x4, offset = 0x4, fixed_abs, tag = 'smem constant byte address 0x4 - core index']
  #allocation1 [shape = 'u32[144,128]{1,0:T(1,128)}', space=vmem, size = 0x12000, scoped, tag = 'internal scratch']
  %s0 = inlined_call_operand.hbm [shape: f32[8,16], index: 0, kind: input, shape index: {}]
  %s1 = inlined_call_operand.hbm [shape: f32[8,16], index: 1, kind: input, shape index: {}]
  %s2 = inlined_call_operand.vmem [shape: f32[1,16], index: 2, kind: input, shape index: {}]
  %s3 = inlined_call_operand.hbm [shape: f32[1,128], index: 3, kind: output, shape index: {}]
  %s4 = sld [smem:[#allocation0]]
  $region30: #{tpu_custom_call.1} parent=0
    _
  %s6 = ssub.s32 1, %s4
  %s7 = scalar_select 0, %s6, %s4
  $region1: #{tpu_custom_call.1} parent=0
    #allocation2 [shape = 'u8[4096]{0}', space=vmem, size = 0x1000, scoped, tag = 'input window, operand 0, single buffered']
    #allocation3 [shape = 's32[1]{0}', space=sflag, size = 0x4, scoped, tag = 'scoped memory for tpu_custom_call.1']
    #allocation4 [shape = 's32[1]{0}', space=sflag, size = 0x4, scoped, tag = 'scoped memory for tpu_custom_call.1']
    #allocation5 [shape = 'u8[4096]{0}', space=vmem, size = 0x1000, scoped, tag = 'input window, operand 1, single buffered']
    #allocation6 [shape = 's32[1]{0}', space=sflag, size = 0x4, scoped, tag = 'scoped memory for tpu_custom_call.1']
    #allocation7 [shape = 'u8[512]{0}', space=vmem, size = 0x400, scoped, tag = 'output window, operand 0, single buffered']
    %8 = vsyncpa [#allocation3], 0
    %9 = vsyncpa [#allocation6], 0
    %10 = vsyncpa [#allocation4], 0
    // Predicated region
    $region2: #{tpu_custom_call.1} parent=1 // pred_check
      _
    $region3: #{tpu_custom_call.1} parent=1 // pred_check_branch
      %12 = sbr.rel (0) target = $region5
    $region4: #{tpu_custom_call.1} parent=1 // pred_region
      %s14 = ssub.s32 128, 128
      %15 = vsyncadd [#allocation3], %s14
      %s17 = sshll.u32 [#allocation2], 4
      %s18 = int_to_ptr.vmem [resolvable:$true] %s17
      %20 = dma.hbm_to_vmem [thread:$0]  %s0, 128, %s18, [#allocation3]
    $region5: #{tpu_custom_call.1} parent=1 // pred_fallthru
      _
    // Predicated region
    $region6: #{tpu_custom_call.1} parent=1 // pred_check
      _
    $region7: #{tpu_custom_call.1} parent=1 // pred_check_branch
      %22 = sbr.rel (0) target = $region9
    $region8: #{tpu_custom_call.1} parent=1 // pred_region
      %s24 = ssub.s32 128, 128
      %25 = vsyncadd [#allocation6], %s24
      %s27 = sshll.u32 [#allocation5], 4
      %s28 = int_to_ptr.vmem [resolvable:$true] %s27
      %30 = dma.hbm_to_vmem [thread:$0]  %s1, 128, %s28, [#allocation6]
    $region9: #{tpu_custom_call.1} parent=1 // pred_fallthru
      _
    // Predicated region
    $region10: #{tpu_custom_call.1} parent=1 // pred_check
      _
    $region11: #{tpu_custom_call.1} parent=1 // pred_check_branch
      %32 = sbr.rel (0) target = $region13
    $region12: #{tpu_custom_call.1} parent=1 // pred_region
      _
    $region13: #{tpu_custom_call.1} parent=1 // pred_fallthru
      _
    // Predicated region
    $region14: #{tpu_custom_call.1} parent=1 // pred_check
      _
    $region15: #{tpu_custom_call.1} parent=1 // pred_check_branch
      %34 = sbr.rel (0) target = $region17
    $region16: #{tpu_custom_call.1} parent=1 // pred_region
      %35 = dma.done [#allocation3], 128
    $region17: #{tpu_custom_call.1} parent=1 // pred_fallthru
      _
    // Predicated region
    $region18: #{tpu_custom_call.1} parent=1 // pred_check
      _
    $region19: #{tpu_custom_call.1} parent=1 // pred_check_branch
      %37 = sbr.rel (0) target = $region21
    $region20: #{tpu_custom_call.1} parent=1 // pred_region
      %38 = dma.done [#allocation6], 128
    $region21: #{tpu_custom_call.1} parent=1 // pred_fallthru
      _
    %v39 = vld [vmem:[#allocation5] sm:$0xff]
    %v40 = vld [vmem:[%s2] sm:$0x1]
    %v41 = vld [vmem:[#allocation2] sm:$0xff]
    %v42 = vmax.f32 %v39, 0.0
    %v44 = vlaneseq
    %v45 = vshrl.u32 %v44, 7
    %v46 = vsub.s32 0, %v45
    %v47 = vrot.slane %v40, %v46
    %v49 = vmul.f32 %v39, %v47
    %v50 = vsub.f32 %v42, %v49
    %v51 = vand.u32 2147483647, %v39
    %v52 = vsub.f32 0.0, %v51
    %v53 = vmul.f32 %v52, 1.442695
    %v54 = vpow.pop %v53
    %v55 = vadd.f32 %v54, 1.0
    %v56 = vlog2.pop %v55
    %v57 = vmul.f32 %v56, 0.6931472
    %v58 = vmul.f32 -0.5, %v54
    %v59 = vadd.f32 %v58, 1.0
    %v60 = vmul.f32 %v59, %v54
    %v61 = vand.u32 2147483647, %v54
    %vm62 = vcmp.lt.f32.partialorder %v61, 0.0004427343
    %v63 = vsel %vm62, %v60, %v57
    %v64 = vadd.f32 %v50, %v63
    %v65 = vmul.f32 %v41, %v64
    %vm66 = vcmask 130048
    %v67 = vsel %vm66, %v65, 0.0
    %68 = vadd.xlane.f32.xlu0 %v67
    %v69 = vpop.xlane.xlu0 %68
    %v70 = vrot.slane %v69, 4
    %v71 = vadd.f32 %v69, %v70
    %v72 = vrot.slane %v71, 2
    %v73 = vadd.f32 %v71, %v72
    %v74 = vrot.slane %v73, 1
    %v75 = vadd.f32 %v73, %v74
    %s76 = vtos %v75
    %s77 = smul.f32 %s76, 0.0625
    %v78 = vstv %s77
    %79 = vst [vmem:[#allocation7] sm:$0x1] %v78
    // Predicated region
    $region22: #{tpu_custom_call.1} parent=1 // pred_check
      _
    $region23: #{tpu_custom_call.1} parent=1 // pred_check_branch
      %81 = sbr.rel (0) target = $region25
    $region24: #{tpu_custom_call.1} parent=1 // pred_region
      %s83 = ssub.s32 16, 16
      %84 = vsyncadd [#allocation4], %s83
      %s86 = sshll.u32 [#allocation7], 4
      %s87 = int_to_ptr.vmem [resolvable:$true] %s86
      %89 = dma.vmem_to_hbm [thread:$0]  %s87, 16, %s3, [#allocation4]
    $region25: #{tpu_custom_call.1} parent=1 // pred_fallthru
      _
    // Predicated region
    $region26: #{tpu_custom_call.1} parent=1 // pred_check
      _
    $region27: #{tpu_custom_call.1} parent=1 // pred_check_branch
      %91 = sbr.rel (0) target = $region29
    $region28: #{tpu_custom_call.1} parent=1 // pred_region
      %92 = dma.done [#allocation4], 16
    $region29: #{tpu_custom_call.1} parent=1 // pred_fallthru
      _
    %93 = vsyncpa [#allocation3], 1
    %94 = vsyncpa [#allocation6], 1
    %95 = vsyncpa [#allocation4], 1

</llo_original>
